<compile_context>
chip_gen: v5e
topology: v5e:2x2
jax: 0.10.0
libtpu: 0.0.40
codegen_flags: <defaults>
</compile_context>

<pallas_src>
import functools

import jax
import jax.numpy as jnp
from jax.experimental import pallas as pl
from jax.experimental.pallas import tpu as pltpu


def _loss_kernel(q_ref, v_ref, r_ref, qn_ref, vn_ref, out_ref, *,
                 rows_total, rows_per_tile, inner_tiles):
    part = pl.program_id(0)   # "parallel" axis (v7x dual-TensorCore row split)
    step = pl.program_id(1)   # "arbitrary" reduction axis

    @pl.when(step == 0)
    def _init():
        out_ref[...] = jnp.zeros_like(out_ref)

    # Residuals in the native dtype; only the two residuals are upcast to f32
    # (VPU), so bf16 inputs stream at half the HBM bytes and pay 2 casts not 5.
    td = (q_ref[...] - (r_ref[...] + qn_ref[...])).astype(jnp.float32)
    vd = (v_ref[...] - vn_ref[...]).astype(jnp.float32)
    sq = td * td + vd * vd

    # In-kernel ragged-tail handling (replaces the old wrapper-side zero pad):
    # rows past the logical end of the input (partial boundary tile, or the
    # overhang tiles created by the 2-way row split) contribute exactly zero.
    tile = part * inner_tiles + step
    valid = rows_total - tile * rows_per_tile          # may be <= 0
    row_id = jax.lax.broadcasted_iota(jnp.int32, sq.shape, 0)
    sq = jnp.where(row_id < valid, sq, 0.0)

    # Per-step sublane reduce (XLU slot has huge slack here) accumulated into
    # row 0 of this part's (8, lanes) output block (VMEM-resident accumulator).
    psum = jnp.sum(sq, axis=0, keepdims=True)          # (1, lanes)
    row0 = jax.lax.broadcasted_iota(jnp.int32, out_ref.shape, 0) == 0
    out_ref[...] += jnp.where(row0, psum, jnp.float32(0.0))


def _as_rows_lanes(x):
    """Collapse to 2-D (rows, lanes) without any padding pass.

    ndim >= 2: collapse leading dims only and keep the natural trailing dim as
    the lane axis (free / near-free reshape; lanes that are not a multiple of
    128 are handled as full-extent lane blocks).  0/1-D: split by 128 when
    divisible, else a single full-extent row.
    """
    if x.ndim >= 2:
        return x.reshape(-1, x.shape[-1])
    n = int(x.size)
    if n >= 128 and n % 128 == 0:
        return x.reshape(-1, 128)
    return x.reshape(1, max(n, 1))


def loss_forward(weight, q, v, r, q_next, v_next, *,
                 target_block_bytes: int = 2 * 1024 * 1024):
    """Weighted TD-style loss: weight * mean((q-(r+q_next))^2 + (v-v_next)^2)."""
    assert q.shape == v.shape == r.shape == q_next.shape == v_next.shape
    w = jnp.asarray(weight, dtype=jnp.float32)
    n = int(q.size)
    if n == 0:
        # mean over zero elements is undefined (torch returns NaN).
        return w * jnp.float32(float("nan"))

    qf, vf, rf, qnf, vnf = (_as_rows_lanes(x) for x in (q, v, r, q_next, v_next))
    rows, lanes = qf.shape
    itemsize = jnp.dtype(qf.dtype).itemsize

    # Sublane packing granularity: 8 (32-bit) / 16 (bf16/f16) / 32 (8-bit).
    sub = {4: 8, 2: 16, 1: 32}.get(itemsize, 8)
    lanes_pad = max(128, -(-lanes // 128) * 128)       # VMEM lane padding

    # Rows per tile: ~target_block_bytes per input block in the native dtype,
    # rounded down to the sublane granularity (bigger tiles amortize the
    # ~0.35 us per-grid-step overhead, crucial on v7x's 3.2 TB/s HBM).
    rows_target = max(sub,
                      target_block_bytes // (lanes_pad * itemsize) // sub * sub)
    if rows <= rows_target:
        rows_per_tile, total_tiles = rows, 1           # full-extent row block
    else:
        rows_per_tile, total_tiles = rows_target, pl.cdiv(rows, rows_target)

    # 2-way row split over a leading "parallel" grid axis (uses both v7x TCs;
    # on single-TC chips the second part just runs sequentially).
    num_parts = 2 if total_tiles >= 2 else 1
    inner_tiles = pl.cdiv(total_tiles, num_parts)

    def in_map(part, step):
        # Overhang tiles of the 2-way split re-read the last real tile; the
        # kernel fully masks them via the *unclamped* tile index.
        return (jnp.minimum(part * inner_tiles + step, total_tiles - 1), 0)

    in_spec = pl.BlockSpec((rows_per_tile, lanes), in_map)
    out_spec = pl.BlockSpec((8, lanes), lambda part, step: (part, 0))

    kernel = functools.partial(
        _loss_kernel, rows_total=rows, rows_per_tile=rows_per_tile,
        inner_tiles=inner_tiles)

    # 5 inputs x 2 pipeline buffers x block.  v5e's 16 MiB default scoped VMEM
    # is too small for 2 MiB blocks, so raise the limit explicitly (still well
    # inside every generation's physical VMEM, including v7x's 64 MiB).
    block_bytes = (-(-rows_per_tile // sub) * sub) * lanes_pad * itemsize
    vmem_limit = int(max(40 * 1024 * 1024, 5 * 2 * block_bytes + (4 << 20)))

    cost = pl.CostEstimate(
        flops=9 * n,
        transcendentals=0,
        bytes_accessed=5 * n * itemsize + num_parts * 8 * lanes * 4)

    partials = pl.pallas_call(
        kernel,
        out_shape=jax.ShapeDtypeStruct((num_parts * 8, lanes), jnp.float32),
        grid=(num_parts, inner_tiles),
        in_specs=[in_spec] * 5,
        out_specs=out_spec,
        compiler_params=pltpu.CompilerParams(
            dimension_semantics=("parallel", "arbitrary"),
            vmem_limit_bytes=vmem_limit),
        cost_estimate=cost,
    )(qf, vf, rf, qnf, vnf)

    # Tiny scalar epilogue (cross-lane/part sum, 1/N, weight) in the wrapper.
    return w * (jnp.sum(partials) / jnp.float32(n))


if __name__ == "__main__":
    key = jax.random.PRNGKey(0)
    weight = jnp.float32(0.5)

    def make(shape, dtype, k):
        ks = jax.random.split(k, 5)
        return [jax.random.normal(kk, shape, dtype=dtype) for kk in ks]

    # 1) f32, natural 128-multiple trailing dim, leading dims collapsed
    #    (zero-copy), single tile.
    q, v, r, qn, vn = make((2, 8, 128), jnp.float32, key)
    out = jax.block_until_ready(loss_forward(weight, q, v, r, qn, vn))
    ref = weight * jnp.mean((q - (r + qn)) ** 2 + (v - vn) ** 2)
    assert jnp.allclose(out, ref, rtol=1e-5, atol=1e-6), (out, ref)

    # 2) bf16, ragged (40, 96) zero-copy path; a tiny block target forces the
    #    multi-tile + 2-part + in-kernel row-masking path (rows_per_tile=16,
    #    grid=(2,2) with one fully-masked overhang tile).
    kb = jax.random.PRNGKey(1)
    qb, vb, rb, qnb, vnb = [x.astype(jnp.bfloat16)
                            for x in make((40, 96), jnp.float32, kb)]
    out2 = jax.block_until_ready(
        loss_forward(weight, qb, vb, rb, qnb, vnb,
                     target_block_bytes=16 * 96 * 2))
    f32 = lambda x: x.astype(jnp.float32)
    ref2 = weight * jnp.mean((f32(qb) - (f32(rb) + f32(qnb))) ** 2
                             + (f32(vb) - f32(vnb)) ** 2)
    assert jnp.allclose(out2, ref2, rtol=2e-2, atol=2e-3), (out2, ref2)

    # 3) 1-D ragged length: single full-extent-lane row block.
    kc = jax.random.PRNGKey(2)
    q1, v1, r1, qn1, vn1 = make((1000,), jnp.float32, kc)
    out3 = jax.block_until_ready(loss_forward(weight, q1, v1, r1, qn1, vn1))
    ref3 = weight * jnp.mean((q1 - (r1 + qn1)) ** 2 + (v1 - vn1) ** 2)
    assert jnp.allclose(out3, ref3, rtol=1e-5, atol=1e-6), (out3, ref3)

    print("KERNEL_OK")
</pallas_src>

<mosaic_0001>
module attributes {stable_mosaic.version = 11 : i64} {
  func.func @_loss_kernel(%arg0: i32, %arg1: i32, %arg2: memref<16x128xf32, #tpu.memory_space<vmem>>, %arg3: memref<16x128xf32, #tpu.memory_space<vmem>>, %arg4: memref<16x128xf32, #tpu.memory_space<vmem>>, %arg5: memref<16x128xf32, #tpu.memory_space<vmem>>, %arg6: memref<16x128xf32, #tpu.memory_space<vmem>>, %arg7: memref<8x128xf32, #tpu.memory_space<vmem>>) attributes {dimension_semantics = [#tpu.dimension_semantics<parallel>, #tpu.dimension_semantics<arbitrary>], iteration_bounds = array<i64: 1, 1>, scalar_prefetch = 0 : i64, scratch_operands = 0 : i64, tpu.core_type = #tpu.core_type<tc>, window_params = [{transform_indices = @transform_0, window_bounds = array<i64: 16, 128>}, {transform_indices = @transform_1, window_bounds = array<i64: 16, 128>}, {transform_indices = @transform_2, window_bounds = array<i64: 16, 128>}, {transform_indices = @transform_3, window_bounds = array<i64: 16, 128>}, {transform_indices = @transform_4, window_bounds = array<i64: 16, 128>}, {transform_indices = @transform_5, window_bounds = array<i64: 8, 128>}]} {
    %c0_i32 = arith.constant 0 : i32
    %0 = arith.cmpi eq, %arg1, %c0_i32 : i32
    %1 = arith.extui %0 : i1 to i32
    %c0_i32_0 = arith.constant 0 : i32
    %2 = arith.cmpi ne, %1, %c0_i32_0 : i32
    scf.if %2 {
      %cst_18 = arith.constant 0.000000e+00 : f32
      %35 = vector.broadcast %cst_18 : f32 to vector<8x128xf32>
      %c0_19 = arith.constant 0 : index
      %c0_20 = arith.constant 0 : index
      %36 = vector.load %arg7[%c0_19, %c0_20] : memref<8x128xf32, #tpu.memory_space<vmem>>, vector<8x128xf32>
      tpu.vector_store %arg7[%c0_19, %c0_20], %35 {strides = array<i32>} : memref<8x128xf32, #tpu.memory_space<vmem>>, vector<8x128xf32>,
    } else {
    }
    %c0 = arith.constant 0 : index
    %c0_1 = arith.constant 0 : index
    %3 = vector.load %arg2[%c0, %c0_1] : memref<16x128xf32, #tpu.memory_space<vmem>>, vector<16x128xf32>
    %c0_2 = arith.constant 0 : index
    %c0_3 = arith.constant 0 : index
    %4 = vector.load %arg4[%c0_2, %c0_3] : memref<16x128xf32, #tpu.memory_space<vmem>>, vector<16x128xf32>
    %c0_4 = arith.constant 0 : index
    %c0_5 = arith.constant 0 : index
    %5 = vector.load %arg5[%c0_4, %c0_5] : memref<16x128xf32, #tpu.memory_space<vmem>>, vector<16x128xf32>
    %6 = arith.addf %4, %5 : vector<16x128xf32>
    %7 = arith.subf %3, %6 : vector<16x128xf32>
    %c0_6 = arith.constant 0 : index
    %c0_7 = arith.constant 0 : index
    %8 = vector.load %arg3[%c0_6, %c0_7] : memref<16x128xf32, #tpu.memory_space<vmem>>, vector<16x128xf32>
    %c0_8 = arith.constant 0 : index
    %c0_9 = arith.constant 0 : index
    %9 = vector.load %arg6[%c0_8, %c0_9] : memref<16x128xf32, #tpu.memory_space<vmem>>, vector<16x128xf32>
    %10 = arith.subf %8, %9 : vector<16x128xf32>
    %11 = arith.mulf %7, %7 : vector<16x128xf32>
    %12 = arith.mulf %10, %10 : vector<16x128xf32>
    %13 = arith.addf %11, %12 : vector<16x128xf32>
    %c1_i32 = arith.constant 1 : i32
    %14 = arith.muli %arg0, %c1_i32 : i32
    %15 = arith.addi %14, %arg1 : i32
    %c16_i32 = arith.constant 16 : i32
    %16 = arith.muli %15, %c16_i32 : i32
    %c16_i32_10 = arith.constant 16 : i32
    %17 = arith.subi %c16_i32_10, %16 : i32
    %18 = tpu.iota {dimensions = array<i32: 0>} : vector<16x128xi32>
    %19 = vector.broadcast %17 : i32 to vector<16x128xi32>
    %20 = arith.cmpi slt, %18, %19 : vector<16x128xi32>
    %cst = arith.constant 0.000000e+00 : f32
    %21 = vector.broadcast %cst : f32 to vector<16x128xf32>
    %22 = arith.select %20, %13, %21 : vector<16x128xi1>, vector<16x128xf32>
    %cst_11 = arith.constant dense<0.000000e+00> : vector<128xf32>
    %23 = vector.multi_reduction <add>, %22, %cst_11 [0] : vector<16x128xf32> to vector<128xf32>
    %24 = vector.shape_cast %23 : vector<128xf32> to vector<1x128xf32>
    %25 = tpu.iota {dimensions = array<i32: 0>} : vector<8x128xi32>
    %c0_i32_12 = arith.constant 0 : i32
    %26 = vector.broadcast %c0_i32_12 : i32 to vector<8x128xi32>
    %27 = arith.cmpi eq, %25, %26 : vector<8x128xi32>
    %c0_13 = arith.constant 0 : index
    %c0_14 = arith.constant 0 : index
    %28 = vector.load %arg7[%c0_13, %c0_14] : memref<8x128xf32, #tpu.memory_space<vmem>>, vector<8x128xf32>
    %cst_15 = arith.constant 0.000000e+00 : f32
    %29 = vector.shape_cast %24 : vector<1x128xf32> to vector<1x128xf32>
    %30 = vector.broadcast %29 : vector<1x128xf32> to vector<8x128xf32>
    %31 = vector.broadcast %cst_15 : f32 to vector<8x128xf32>
    %32 = arith.select %27, %30, %31 : vector<8x128xi1>, vector<8x128xf32>
    %33 = arith.addf %28, %32 : vector<8x128xf32>
    %c0_16 = arith.constant 0 : index
    %c0_17 = arith.constant 0 : index
    %34 = vector.load %arg7[%c0_16, %c0_17] : memref<8x128xf32, #tpu.memory_space<vmem>>, vector<8x128xf32>
    tpu.vector_store %arg7[%c0_16, %c0_17], %33 {strides = array<i32>} : memref<8x128xf32, #tpu.memory_space<vmem>>, vector<8x128xf32>,
    return
  }
  func.func @transform_0(%arg0: i32, %arg1: i32) -> (i32, i32) {
    %c1_i32 = arith.constant 1 : i32
    %0 = arith.muli %arg0, %c1_i32 : i32
    %1 = arith.addi %0, %arg1 : i32
    %c0_i32 = arith.constant 0 : i32
    %2 = arith.minsi %1, %c0_i32 : i32
    %c0_i32_0 = arith.constant 0 : i32
    %c0_i32_1 = arith.constant 0 : i32
    return %2, %c0_i32_0 : i32, i32
  }
  func.func @transform_1(%arg0: i32, %arg1: i32) -> (i32, i32) {
    %c1_i32 = arith.constant 1 : i32
    %0 = arith.muli %arg0, %c1_i32 : i32
    %1 = arith.addi %0, %arg1 : i32
    %c0_i32 = arith.constant 0 : i32
    %2 = arith.minsi %1, %c0_i32 : i32
    %c0_i32_0 = arith.constant 0 : i32
    %c0_i32_1 = arith.constant 0 : i32
    return %2, %c0_i32_0 : i32, i32
  }
  func.func @transform_2(%arg0: i32, %arg1: i32) -> (i32, i32) {
    %c1_i32 = arith.constant 1 : i32
    %0 = arith.muli %arg0, %c1_i32 : i32
    %1 = arith.addi %0, %arg1 : i32
    %c0_i32 = arith.constant 0 : i32
    %2 = arith.minsi %1, %c0_i32 : i32
    %c0_i32_0 = arith.constant 0 : i32
    %c0_i32_1 = arith.constant 0 : i32
    return %2, %c0_i32_0 : i32, i32
  }
  func.func @transform_3(%arg0: i32, %arg1: i32) -> (i32, i32) {
    %c1_i32 = arith.constant 1 : i32
    %0 = arith.muli %arg0, %c1_i32 : i32
    %1 = arith.addi %0, %arg1 : i32
    %c0_i32 = arith.constant 0 : i32
    %2 = arith.minsi %1, %c0_i32 : i32
    %c0_i32_0 = arith.constant 0 : i32
    %c0_i32_1 = arith.constant 0 : i32
    return %2, %c0_i32_0 : i32, i32
  }
  func.func @transform_4(%arg0: i32, %arg1: i32) -> (i32, i32) {
    %c1_i32 = arith.constant 1 : i32
    %0 = arith.muli %arg0, %c1_i32 : i32
    %1 = arith.addi %0, %arg1 : i32
    %c0_i32 = arith.constant 0 : i32
    %2 = arith.minsi %1, %c0_i32 : i32
    %c0_i32_0 = arith.constant 0 : i32
    %c0_i32_1 = arith.constant 0 : i32
    return %2, %c0_i32_0 : i32, i32
  }
  func.func @transform_5(%arg0: i32, %arg1: i32) -> (i32, i32) {
    %c0_i32 = arith.constant 0 : i32
    %c0_i32_0 = arith.constant 0 : i32
    return %arg0, %c0_i32 : i32, i32
  }
}

</mosaic_0001>

<llo_original>
// kernel: tpu_custom_call.1
$region0: #{tpu_custom_call.1}
  #allocation0 [shape = 'u32[]', space=smem, size = 0x4, offset = 0x4, fixed_abs, tag = 'smem constant byte address 0x4 - core index']
  #allocation1 [shape = 'u32[72,128]{1,0:T(1,128)}', space=vmem, size = 0x9000, scoped, tag = 'internal scratch']
  %s0 = inlined_call_operand.hbm [shape: f32[16,128], index: 0, kind: input, shape index: {}]
  %s1 = inlined_call_operand.hbm [shape: f32[16,128], index: 1, kind: input, shape index: {}]
  %s2 = inlined_call_operand.hbm [shape: f32[16,128], index: 2, kind: input, shape index: {}]
  %s3 = inlined_call_operand.hbm [shape: f32[16,128], index: 3, kind: input, shape index: {}]
  %s4 = inlined_call_operand.hbm [shape: f32[16,128], index: 4, kind: input, shape index: {}]
  %s5 = inlined_call_operand.hbm [shape: f32[8,128], index: 5, kind: output, shape index: {}]
  %s6 = sld [smem:[#allocation0]]
  $region54: #{tpu_custom_call.1} parent=0
    _
  %s8 = ssub.s32 1, %s6
  %s9 = scalar_select 0, %s8, %s6
  $region1: #{tpu_custom_call.1} parent=0
    #allocation2 [shape = 'u8[8192]{0}', space=vmem, size = 0x2000, scoped, tag = 'input window, operand 0, single buffered']
    #allocation3 [shape = 's32[1]{0}', space=sflag, size = 0x4, scoped, tag = 'scoped memory for tpu_custom_call.1']
    #allocation4 [shape = 's32[1]{0}', space=sflag, size = 0x4, scoped, tag = 'scoped memory for tpu_custom_call.1']
    #allocation5 [shape = 'u8[8192]{0}', space=vmem, size = 0x2000, scoped, tag = 'input window, operand 1, single buffered']
    #allocation6 [shape = 's32[1]{0}', space=sflag, size = 0x4, scoped, tag = 'scoped memory for tpu_custom_call.1']
    #allocation7 [shape = 'u8[8192]{0}', space=vmem, size = 0x2000, scoped, tag = 'input window, operand 2, single buffered']
    #allocation8 [shape = 'u8[8192]{0}', space=vmem, size = 0x2000, scoped, tag = 'input window, operand 3, single buffered']
    #allocation9 [shape = 's32[1]{0}', space=sflag, size = 0x4, scoped, tag = 'scoped memory for tpu_custom_call.1']
    #allocation10 [shape = 'u8[8192]{0}', space=vmem, size = 0x2000, scoped, tag = 'input window, operand 4, single buffered']
    #allocation11 [shape = 'u8[4096]{0}', space=vmem, size = 0x1000, scoped, tag = 'output window, operand 0, single buffered']
    %10 = vsyncpa [#allocation3], 0
    %11 = vsyncpa [#allocation6], 0
    %12 = vsyncpa [#allocation9], 0
    %13 = vsyncpa [#allocation4], 0
    // Predicated region
    $region2: #{tpu_custom_call.1} parent=1 // pred_check
      _
    $region3: #{tpu_custom_call.1} parent=1 // pred_check_branch
      %15 = sbr.rel (0) target = $region5
    $region4: #{tpu_custom_call.1} parent=1 // pred_region
      %s16 = sadd.s32 0, 0
      %p17 = scmp.lt.s32.totalorder %s16, 0
      %s18 = scalar_select %p17, %s16, 0
      %s19 = smul.u32 2, %s18
      %21 = vsyncadd [#allocation3], 0
      %s22 = smul.addr %s19, 8
      %s23 = scalar_lea.hbm %s0, %s22
      %s24 = sshll.u32 %s23, 4
      %s25 = int_to_ptr.hbm [resolvable:$true] %s24
      %s26 = sshll.u32 [#allocation2], 4
      %s27 = int_to_ptr.vmem [resolvable:$true] %s26
      %32 = dma.hbm_to_vmem [thread:$0]  %s25, 256, %s27, [#allocation3], 128, 128, 8
    $region5: #{tpu_custom_call.1} parent=1 // pred_fallthru
      _
    // Predicated region
    $region6: #{tpu_custom_call.1} parent=1 // pred_check
      _
    $region7: #{tpu_custom_call.1} parent=1 // pred_check_branch
      %34 = sbr.rel (0) target = $region9
    $region8: #{tpu_custom_call.1} parent=1 // pred_region
      %s35 = sadd.s32 0, 0
      %p36 = scmp.lt.s32.totalorder %s35, 0
      %s37 = scalar_select %p36, %s35, 0
      %s38 = smul.u32 2, %s37
      %40 = vsyncadd [#allocation6], 0
      %s41 = smul.addr %s38, 8
      %s42 = scalar_lea.hbm %s1, %s41
      %s43 = sshll.u32 %s42, 4
      %s44 = int_to_ptr.hbm [resolvable:$true] %s43
      %s45 = sshll.u32 [#allocation5], 4
      %s46 = int_to_ptr.vmem [resolvable:$true] %s45
      %51 = dma.hbm_to_vmem [thread:$0]  %s44, 256, %s46, [#allocation6], 128, 128, 8
    $region9: #{tpu_custom_call.1} parent=1 // pred_fallthru
      _
    // Predicated region
    $region10: #{tpu_custom_call.1} parent=1 // pred_check
      _
    $region11: #{tpu_custom_call.1} parent=1 // pred_check_branch
      %53 = sbr.rel (0) target = $region13
    $region12: #{tpu_custom_call.1} parent=1 // pred_region
      %s54 = sadd.s32 0, 0
      %p55 = scmp.lt.s32.totalorder %s54, 0
      %s56 = scalar_select %p55, %s54, 0
      %s57 = smul.u32 2, %s56
      %59 = vsyncadd [#allocation6], 0
      %s60 = smul.addr %s57, 8
      %s61 = scalar_lea.hbm %s2, %s60
      %s62 = sshll.u32 %s61, 4
      %s63 = int_to_ptr.hbm [resolvable:$true] %s62
      %s64 = sshll.u32 [#allocation7], 4
      %s65 = int_to_ptr.vmem [resolvable:$true] %s64
      %70 = dma.hbm_to_vmem [thread:$0]  %s63, 256, %s65, [#allocation6], 128, 128, 8
    $region13: #{tpu_custom_call.1} parent=1 // pred_fallthru
      _
    // Predicated region
    $region14: #{tpu_custom_call.1} parent=1 // pred_check
      _
    $region15: #{tpu_custom_call.1} parent=1 // pred_check_branch
      %72 = sbr.rel (0) target = $region17
    $region16: #{tpu_custom_call.1} parent=1 // pred_region
      %s73 = sadd.s32 0, 0
      %p74 = scmp.lt.s32.totalorder %s73, 0
      %s75 = scalar_select %p74, %s73, 0
      %s76 = smul.u32 2, %s75
      %78 = vsyncadd [#allocation9], 0
      %s79 = smul.addr %s76, 8
      %s80 = scalar_lea.hbm %s3, %s79
      %s81 = sshll.u32 %s80, 4
      %s82 = int_to_ptr.hbm [resolvable:$true] %s81
      %s83 = sshll.u32 [#allocation8], 4
      %s84 = int_to_ptr.vmem [resolvable:$true] %s83
      %89 = dma.hbm_to_vmem [thread:$0]  %s82, 256, %s84, [#allocation9], 128, 128, 8
    $region17: #{tpu_custom_call.1} parent=1 // pred_fallthru
      _
    // Predicated region
    $region18: #{tpu_custom_call.1} parent=1 // pred_check
      _
    $region19: #{tpu_custom_call.1} parent=1 // pred_check_branch
      %91 = sbr.rel (0) target = $region21
    $region20: #{tpu_custom_call.1} parent=1 // pred_region
      %s92 = sadd.s32 0, 0
      %p93 = scmp.lt.s32.totalorder %s92, 0
      %s94 = scalar_select %p93, %s92, 0
      %s95 = smul.u32 2, %s94
      %97 = vsyncadd [#allocation9], 0
      %s98 = smul.addr %s95, 8
      %s99 = scalar_lea.hbm %s4, %s98
      %s100 = sshll.u32 %s99, 4
      %s101 = int_to_ptr.hbm [resolvable:$true] %s100
      %s102 = sshll.u32 [#allocation10], 4
      %s103 = int_to_ptr.vmem [resolvable:$true] %s102
      %108 = dma.hbm_to_vmem [thread:$0]  %s101, 256, %s103, [#allocation9], 128, 128, 8
    $region21: #{tpu_custom_call.1} parent=1 // pred_fallthru
      _
    // Predicated region
    $region22: #{tpu_custom_call.1} parent=1 // pred_check
      _
    $region23: #{tpu_custom_call.1} parent=1 // pred_check_branch
      %110 = sbr.rel (0) target = $region25
    $region24: #{tpu_custom_call.1} parent=1 // pred_region
      %112 = dma.done [#allocation3], 256
    $region25: #{tpu_custom_call.1} parent=1 // pred_fallthru
      _
    // Predicated region
    $region26: #{tpu_custom_call.1} parent=1 // pred_check
      _
    $region27: #{tpu_custom_call.1} parent=1 // pred_check_branch
      %114 = sbr.rel (0) target = $region29
    $region28: #{tpu_custom_call.1} parent=1 // pred_region
      %116 = dma.done [#allocation6], 256
    $region29: #{tpu_custom_call.1} parent=1 // pred_fallthru
      _
    // Predicated region
    $region30: #{tpu_custom_call.1} parent=1 // pred_check
      _
    $region31: #{tpu_custom_call.1} parent=1 // pred_check_branch
      %118 = sbr.rel (0) target = $region33
    $region32: #{tpu_custom_call.1} parent=1 // pred_region
      %120 = dma.done [#allocation6], 256
    $region33: #{tpu_custom_call.1} parent=1 // pred_fallthru
      _
    // Predicated region
    $region34: #{tpu_custom_call.1} parent=1 // pred_check
      _
    $region35: #{tpu_custom_call.1} parent=1 // pred_check_branch
      %122 = sbr.rel (0) target = $region37
    $region36: #{tpu_custom_call.1} parent=1 // pred_region
      %124 = dma.done [#allocation9], 256
    $region37: #{tpu_custom_call.1} parent=1 // pred_fallthru
      _
    // Predicated region
    $region38: #{tpu_custom_call.1} parent=1 // pred_check
      _
    $region39: #{tpu_custom_call.1} parent=1 // pred_check_branch
      %126 = sbr.rel (0) target = $region41
    $region40: #{tpu_custom_call.1} parent=1 // pred_region
      %128 = dma.done [#allocation9], 256
    $region41: #{tpu_custom_call.1} parent=1 // pred_fallthru
      _
    %s129 = sadd.s32 0, 0
    %p130 = scmp.lt.s32.totalorder %s129, 0
    %s131 = scalar_select %p130, %s129, 0
    %s132 = smul.u32 2, %s131
    %s133 = sadd.s32 0, 0
    %p134 = scmp.lt.s32.totalorder %s133, 0
    %s135 = scalar_select %p134, %s133, 0
    %s136 = smul.u32 2, %s135
    %s137 = sadd.s32 0, 0
    %p138 = scmp.lt.s32.totalorder %s137, 0
    %s139 = scalar_select %p138, %s137, 0
    %s140 = smul.u32 2, %s139
    %s141 = sadd.s32 0, 0
    %p142 = scmp.lt.s32.totalorder %s141, 0
    %s143 = scalar_select %p142, %s141, 0
    %s144 = smul.u32 2, %s143
    %s145 = sadd.s32 0, 0
    %p146 = scmp.lt.s32.totalorder %s145, 0
    %s147 = scalar_select %p146, %s145, 0
    %s148 = smul.u32 2, %s147
    %p149 = scmp.eq.s32.totalorder 0, 0
    // Predicated region
    $region42: #{tpu_custom_call.1} parent=1 // pred_check
      %p150 = pneg %p149
    $region43: #{tpu_custom_call.1} parent=1 // pred_check_branch
      %152 = sbr.rel (%p150) target = $region45
    $region44: #{tpu_custom_call.1} parent=1 // pred_region
      %153 = vst [vmem:[#allocation11] sm:$0xff] 0.0
    $region45: #{tpu_custom_call.1} parent=1 // pred_fallthru
      _
    %v154 = vld [vmem:[#allocation2] sm:$0xff]
    %v155 = vld [vmem:[#allocation2 + $0x8] sm:$0xff]
    %v156 = vld [vmem:[#allocation7] sm:$0xff]
    %v157 = vld [vmem:[#allocation7 + $0x8] sm:$0xff]
    %v158 = vld [vmem:[#allocation8] sm:$0xff]
    %v159 = vld [vmem:[#allocation8 + $0x8] sm:$0xff]
    %v160 = vadd.f32 %v156, %v158
    %v161 = vadd.f32 %v157, %v159
    %v162 = vsub.f32 %v154, %v160
    %v163 = vsub.f32 %v155, %v161
    %v164 = vld [vmem:[#allocation5] sm:$0xff]
    %v165 = vld [vmem:[#allocation5 + $0x8] sm:$0xff]
    %v166 = vld [vmem:[#allocation10] sm:$0xff]
    %v167 = vld [vmem:[#allocation10 + $0x8] sm:$0xff]
    %v168 = vsub.f32 %v164, %v166
    %v169 = vsub.f32 %v165, %v167
    %v170 = vmul.f32 %v162, %v162
    %v171 = vmul.f32 %v163, %v163
    %v172 = vmul.f32 %v168, %v168
    %v173 = vmul.f32 %v169, %v169
    %v174 = vadd.f32 %v170, %v172
    %v175 = vadd.f32 %v171, %v173
    %s176 = sadd.s32 0, 0
    %s177 = smul.u32 %s176, 16
    %s178 = ssub.s32 16, %s177
    %v179 = vlaneseq
    %v180 = vshrl.u32 %v179, 7
    %v181 = vadd.s32 %v180, 8
    %v182 = vstv %s178
    %vm183 = vcmp.lt.s32.totalorder %v180, %v182
    %vm184 = vcmp.lt.s32.totalorder %v181, %v182
    %v185 = vsel %vm183, %v174, 0.0
    %v186 = vsel %vm184, %v175, 0.0
    %v187 = vadd.f32 %v185, %v186
    %v188 = vrot.slane %v187, 4
    %v189 = vadd.f32 %v187, %v188
    %v190 = vrot.slane %v189, 2
    %v191 = vadd.f32 %v189, %v190
    %v192 = vrot.slane %v191, 1
    %v193 = vadd.f32 %v191, %v192
    %vm194 = vcmp.eq.s32.totalorder %v180, 0
    %v195 = vld [vmem:[#allocation11] sm:$0xff]
    %v196 = vsel %vm194, %v193, 0.0
    %v197 = vadd.f32 %v195, %v196
    %198 = vst [vmem:[#allocation11] sm:$0xff] %v197
    // Predicated region
    $region46: #{tpu_custom_call.1} parent=1 // pred_check
      _
    $region47: #{tpu_custom_call.1} parent=1 // pred_check_branch
      %200 = sbr.rel (0) target = $region49
    $region48: #{tpu_custom_call.1} parent=1 // pred_region
      %202 = vsyncadd [#allocation4], 0
      %s204 = sshll.u32 [#allocation11], 4
      %s205 = int_to_ptr.vmem [resolvable:$true] %s204
      %s206 = sshll.u32 %s5, 4
      %s207 = int_to_ptr.hbm [resolvable:$true] %s206
      %209 = dma.vmem_to_hbm [thread:$0]  %s205, 128, %s207, [#allocation4]
    $region49: #{tpu_custom_call.1} parent=1 // pred_fallthru
      _
    // Predicated region
    $region50: #{tpu_custom_call.1} parent=1 // pred_check
      _
    $region51: #{tpu_custom_call.1} parent=1 // pred_check_branch
      %211 = sbr.rel (0) target = $region53
    $region52: #{tpu_custom_call.1} parent=1 // pred_region
      %213 = dma.done [#allocation4], 128
    $region53: #{tpu_custom_call.1} parent=1 // pred_fallthru
      _
    %214 = vsyncpa [#allocation3], 1
    %215 = vsyncpa [#allocation6], 1
    %216 = vsyncpa [#allocation9], 1
    %217 = vsyncpa [#allocation4], 1

</llo_original>
